<compile_context>
chip_gen: v6e
topology: v6e:2x2x1
jax: 0.10.0
libtpu: 0.0.40
codegen_flags: <defaults>
</compile_context>

<pallas_src>
import jax
import jax.numpy as jnp
from jax.experimental import pallas as pl
from jax.experimental.pallas import tpu as pltpu


LANE_C = 512           # slab width: 4 full vregs of lanes -> unmasked stores
MAX_TILE_ROWS = 2048   # 2048 x 512 f32 = 4 MiB per tile buffer


def _pick_tile_rows(rows: int) -> int:
    """Tile rows: multiple of 8 (sublane), <= MAX_TILE_ROWS, >= 2 grid steps
    whenever the row count allows it (v7x dual-TC sharding)."""
    if rows <= 8:
        return rows                      # block == full array dim -> allowed
    tr = min(MAX_TILE_ROWS, (rows // 8) * 8)
    if -(-rows // tr) < 2:               # would be a single grid step -> split
        half = -(-rows // 2)
        tr = max(8, ((half + 7) // 8) * 8)
    return tr


def _pos_or_neg_kernel(w_ref, b_ref, x_ref, o_ref):
    # w_ref / b_ref are (1, 1) scalars in SMEM (the Linear(1, 1) parameters).
    w = w_ref[0, 0]
    b = b_ref[0, 0]
    z = x_ref[...] * w + b                         # affine on the VPU
    # Exact sigmoid: exp lands on the EUP slot (free in this mem-bound kernel),
    # divide is exact.  For very negative z, exp(-z) -> inf and the quotient
    # saturates to 0.0 (the correct limit, no NaN in f32).
    o_ref[...] = 1.0 / (1.0 + jnp.exp(-z))


def positive_or_negative(x, weight, bias):
    """x: (N, 1) float32; weight: (1, 1); bias: (1,). Returns (N, 1) float32."""
    n = x.shape[0]
    w = weight.reshape(1, 1).astype(jnp.float32)
    b = bias.reshape(1, 1).astype(jnp.float32)
    flat = x.reshape(-1).astype(jnp.float32)

    n_main = (n // LANE_C) * LANE_C                # 512-aligned prefix
    tail = n - n_main

    parts = []
    if n_main:
        rows = n_main // LANE_C
        tile_rows = _pick_tile_rows(rows)
        grid = (pl.cdiv(rows, tile_rows),)
        # Free bitcast-reshape when tail == 0; otherwise only the aligned
        # prefix feeds the kernel (no materialized jnp.pad of the input).
        slab = flat[:n_main].reshape(rows, LANE_C)

        out_slab = pl.pallas_call(
            _pos_or_neg_kernel,
            out_shape=jax.ShapeDtypeStruct((rows, LANE_C), jnp.float32),
            grid=grid,
            in_specs=[
                pl.BlockSpec(memory_space=pltpu.MemorySpace.SMEM),   # weight
                pl.BlockSpec(memory_space=pltpu.MemorySpace.SMEM),   # bias
                pl.BlockSpec((tile_rows, LANE_C), lambda i: (i, 0)),  # x tile
            ],
            out_specs=pl.BlockSpec((tile_rows, LANE_C), lambda i: (i, 0)),
            compiler_params=pltpu.CompilerParams(
                dimension_semantics=("parallel",),   # megacore / v7x dual-TC
                vmem_limit_bytes=32 * 1024 * 1024,   # 16 MiB tiles + headroom
            ),
        )(w, b, slab)
        parts.append(out_slab.reshape(-1))           # free reshape

    if tail:
        # <512 leftover elements: plain jnp, negligible vs the kernel's work.
        t = flat[n_main:]
        zt = t * w[0, 0] + b[0, 0]
        parts.append(1.0 / (1.0 + jnp.exp(-zt)))

    out = parts[0] if len(parts) == 1 else jnp.concatenate(parts)
    return out.reshape(n, 1)


def reference(x, weight, bias):
    return jax.nn.sigmoid(x @ weight.T + bias)


if __name__ == "__main__":
    key = jax.random.PRNGKey(0)
    kx1, kx2, kx3, kw, kb = jax.random.split(key, 5)

    # nn.Linear(1, 1) init: U(-1/sqrt(fan_in), 1/sqrt(fan_in)) with fan_in = 1.
    weight = jax.random.uniform(kw, (1, 1), jnp.float32, -1.0, 1.0)
    bias = jax.random.uniform(kb, (1,), jnp.float32, -1.0, 1.0)

    # (a) 512-aligned batch -> pure Pallas path, zero pad/slice/concat copies.
    x1 = jax.random.normal(kx1, (2048, 1), jnp.float32)
    out1 = jax.block_until_ready(positive_or_negative(x1, weight, bias))
    assert out1.shape == (2048, 1)
    assert jnp.allclose(out1, reference(x1, weight, bias), atol=1e-5)

    # (b) unaligned batch -> kernel on the 512-aligned prefix + jnp tail.
    x2 = jax.random.normal(kx2, (3000, 1), jnp.float32)
    out2 = jax.block_until_ready(positive_or_negative(x2, weight, bias))
    assert out2.shape == (3000, 1)
    assert jnp.allclose(out2, reference(x2, weight, bias), atol=1e-5)

    # (c) tiny batch (< one slab row) -> tail-only path.
    x3 = jax.random.normal(kx3, (8, 1), jnp.float32)
    out3 = jax.block_until_ready(positive_or_negative(x3, weight, bias))
    assert out3.shape == (8, 1)
    assert jnp.allclose(out3, reference(x3, weight, bias), atol=1e-5)

    print("KERNEL_OK")
</pallas_src>

<mosaic_0001>
module attributes {stable_mosaic.version = 11 : i64} {
  func.func @_pos_or_neg_kernel(%arg0: i32, %arg1: memref<1x1xf32, #tpu.memory_space<smem>>, %arg2: memref<1x1xf32, #tpu.memory_space<smem>>, %arg3: memref<4x512xf32, #tpu.memory_space<vmem>>, %arg4: memref<4x512xf32, #tpu.memory_space<vmem>>) attributes {dimension_semantics = [#tpu.dimension_semantics<parallel>], iteration_bounds = array<i64: 1>, scalar_prefetch = 0 : i64, scratch_operands = 0 : i64, tpu.core_type = #tpu.core_type<tc>, window_params = [{transform_indices = @transform_0, window_bounds = array<i64: 1, 1>}, {transform_indices = @transform_1, window_bounds = array<i64: 1, 1>}, {transform_indices = @transform_2, window_bounds = array<i64: 4, 512>}, {transform_indices = @transform_3, window_bounds = array<i64: 4, 512>}]} {
    %c0 = arith.constant 0 : index
    %c0_0 = arith.constant 0 : index
    %0 = memref.load %arg1[%c0, %c0_0] : memref<1x1xf32, #tpu.memory_space<smem>>
    %c0_1 = arith.constant 0 : index
    %c0_2 = arith.constant 0 : index
    %1 = memref.load %arg2[%c0_1, %c0_2] : memref<1x1xf32, #tpu.memory_space<smem>>
    %c0_3 = arith.constant 0 : index
    %c0_4 = arith.constant 0 : index
    %2 = vector.load %arg3[%c0_3, %c0_4] : memref<4x512xf32, #tpu.memory_space<vmem>>, vector<4x512xf32>
    %3 = vector.broadcast %0 : f32 to vector<4x512xf32>
    %4 = arith.mulf %2, %3 : vector<4x512xf32>
    %5 = vector.broadcast %1 : f32 to vector<4x512xf32>
    %6 = arith.addf %4, %5 : vector<4x512xf32>
    %cst = arith.constant 0.000000e+00 : f32
    %7 = vector.broadcast %cst : f32 to vector<4x512xf32>
    %8 = arith.subf %7, %6 : vector<4x512xf32>
    %9 = math.exp %8 : vector<4x512xf32>
    %cst_5 = arith.constant 1.000000e+00 : f32
    %10 = vector.broadcast %cst_5 : f32 to vector<4x512xf32>
    %11 = arith.addf %10, %9 : vector<4x512xf32>
    %cst_6 = arith.constant 1.000000e+00 : f32
    %12 = vector.broadcast %cst_6 : f32 to vector<4x512xf32>
    %13 = arith.divf %12, %11 : vector<4x512xf32>
    %c0_7 = arith.constant 0 : index
    %c0_8 = arith.constant 0 : index
    %14 = vector.load %arg4[%c0_7, %c0_8] : memref<4x512xf32, #tpu.memory_space<vmem>>, vector<4x512xf32>
    tpu.vector_store %arg4[%c0_7, %c0_8], %13 {strides = array<i32>} : memref<4x512xf32, #tpu.memory_space<vmem>>, vector<4x512xf32>,
    return
  }
  func.func @transform_0(%arg0: i32) -> (i32, i32) {
    %c0_i32 = arith.constant 0 : i32
    %c0_i32_0 = arith.constant 0 : i32
    %c0_i32_1 = arith.constant 0 : i32
    return %c0_i32, %c0_i32_0 : i32, i32
  }
  func.func @transform_1(%arg0: i32) -> (i32, i32) {
    %c0_i32 = arith.constant 0 : i32
    %c0_i32_0 = arith.constant 0 : i32
    %c0_i32_1 = arith.constant 0 : i32
    return %c0_i32, %c0_i32_0 : i32, i32
  }
  func.func @transform_2(%arg0: i32) -> (i32, i32) {
    %c0_i32 = arith.constant 0 : i32
    %c0_i32_0 = arith.constant 0 : i32
    return %arg0, %c0_i32 : i32, i32
  }
  func.func @transform_3(%arg0: i32) -> (i32, i32) {
    %c0_i32 = arith.constant 0 : i32
    %c0_i32_0 = arith.constant 0 : i32
    return %arg0, %c0_i32 : i32, i32
  }
}

</mosaic_0001>

<llo_original>
// kernel: tpu_custom_call.1
$region0: #{tpu_custom_call.1}
  #allocation0 [shape = 'u32[]', space=smem, size = 0x4, offset = 0x4, fixed_abs, tag = 'smem constant byte address 0x4 - core index']
  #allocation1 [shape = 'u32[144,128]{1,0:T(1,128)}', space=vmem, size = 0x12000, scoped, tag = 'internal scratch']
  #allocation2 [shape = 'f32[1,1]{1,0:T(1,128)S(6)}', space=smem, size = 0x200, scoped, tag = 'scoped memory for tpu_custom_call.1']
  #allocation3 [shape = 'f32[1,1]{1,0:T(1,128)S(6)}', space=smem, size = 0x200, scoped, tag = 'scoped memory for tpu_custom_call.1']
  %s0 = inlined_call_operand.<no memory space> [shape: f32[1,1], index: 0, kind: input, shape index: {}]
  %s1 = inlined_call_operand.<no memory space> [shape: f32[1,1], index: 1, kind: input, shape index: {}]
  %s2 = inlined_call_operand.hbm [shape: f32[4,512], index: 2, kind: input, shape index: {}]
  %s3 = inlined_call_operand.hbm [shape: f32[4,512], index: 3, kind: output, shape index: {}]
  %s4 = sld [smem:[#allocation0]]
  $region26: #{tpu_custom_call.1} parent=0
    _
  %s6 = ssub.s32 1, %s4
  %s7 = scalar_select 0, %s6, %s4
  %8 = sst [smem:[#allocation2]] %s0
  %9 = sst [smem:[#allocation3]] %s1
  $region1: #{tpu_custom_call.1} parent=0
    #allocation4 [shape = 'u8[8192]{0}', space=vmem, size = 0x2000, scoped, tag = 'input window, operand 2, single buffered']
    #allocation5 [shape = 's32[1]{0}', space=sflag, size = 0x4, scoped, tag = 'scoped memory for tpu_custom_call.1']
    #allocation6 [shape = 's32[1]{0}', space=sflag, size = 0x4, scoped, tag = 'scoped memory for tpu_custom_call.1']
    #allocation7 [shape = 'u8[8192]{0}', space=vmem, size = 0x2000, scoped, tag = 'output window, operand 0, single buffered']
    %10 = vsyncpa [#allocation5], 0
    %11 = vsyncpa [#allocation6], 0
    // Predicated region
    $region2: #{tpu_custom_call.1} parent=1 // pred_check
      _
    $region3: #{tpu_custom_call.1} parent=1 // pred_check_branch
      %13 = sbr.rel (0) target = $region5
    $region4: #{tpu_custom_call.1} parent=1 // pred_region
      _
    $region5: #{tpu_custom_call.1} parent=1 // pred_fallthru
      _
    // Predicated region
    $region6: #{tpu_custom_call.1} parent=1 // pred_check
      _
    $region7: #{tpu_custom_call.1} parent=1 // pred_check_branch
      %15 = sbr.rel (0) target = $region9
    $region8: #{tpu_custom_call.1} parent=1 // pred_region
      _
    $region9: #{tpu_custom_call.1} parent=1 // pred_fallthru
      _
    // Predicated region
    $region10: #{tpu_custom_call.1} parent=1 // pred_check
      _
    $region11: #{tpu_custom_call.1} parent=1 // pred_check_branch
      %17 = sbr.rel (0) target = $region13
    $region12: #{tpu_custom_call.1} parent=1 // pred_region
      %s19 = ssub.s32 256, 256
      %20 = vsyncadd [#allocation5], %s19
      %s22 = sshll.u32 [#allocation4], 4
      %s23 = int_to_ptr.vmem [resolvable:$true] %s22
      %25 = dma.hbm_to_vmem [thread:$0]  %s2, 256, %s23, [#allocation5]
    $region13: #{tpu_custom_call.1} parent=1 // pred_fallthru
      _
    // Predicated region
    $region14: #{tpu_custom_call.1} parent=1 // pred_check
      _
    $region15: #{tpu_custom_call.1} parent=1 // pred_check_branch
      %27 = sbr.rel (0) target = $region17
    $region16: #{tpu_custom_call.1} parent=1 // pred_region
      %28 = dma.done [#allocation5], 256
    $region17: #{tpu_custom_call.1} parent=1 // pred_fallthru
      _
    %s29 = sld [smem:[#allocation2]]
    %s30 = sld [smem:[#allocation3]]
    %v31 = vld [vmem:[#allocation4] sm:$0xff]
    %v32 = vld [vmem:[#allocation4 + $0x8] sm:$0xff]
    %v33 = vstv %s29
    %v34 = vmul.f32 %v31, %v33
    %v35 = vmul.f32 %v32, %v33
    %v36 = vstv %s30
    %v37 = vadd.f32 %v34, %v36
    %v38 = vadd.f32 %v35, %v36
    %v39 = vsub.f32 0.0, %v37
    %v40 = vsub.f32 0.0, %v38
    %v41 = vmul.f32 %v39, 1.442695
    %v42 = vpow.pop %v41
    %v43 = vmul.f32 %v40, 1.442695
    %v44 = vpow.pop %v43
    %v45 = vadd.f32 %v42, 1.0
    %v46 = vadd.f32 %v44, 1.0
    %v47 = vrcp.pop %v45
    %v48 = vmul.f32 1.0, %v47
    %v49 = vrcp.pop %v46
    %v50 = vmul.f32 1.0, %v49
    %51 = vst [vmem:[#allocation7] sm:$0xff] %v48
    %52 = vst [vmem:[#allocation7 + $0x8] sm:$0xff] %v50
    // Predicated region
    $region18: #{tpu_custom_call.1} parent=1 // pred_check
      _
    $region19: #{tpu_custom_call.1} parent=1 // pred_check_branch
      %54 = sbr.rel (0) target = $region21
    $region20: #{tpu_custom_call.1} parent=1 // pred_region
      %s56 = ssub.s32 256, 256
      %57 = vsyncadd [#allocation6], %s56
      %s59 = sshll.u32 [#allocation7], 4
      %s60 = int_to_ptr.vmem [resolvable:$true] %s59
      %62 = dma.vmem_to_hbm [thread:$0]  %s60, 256, %s3, [#allocation6]
    $region21: #{tpu_custom_call.1} parent=1 // pred_fallthru
      _
    // Predicated region
    $region22: #{tpu_custom_call.1} parent=1 // pred_check
      _
    $region23: #{tpu_custom_call.1} parent=1 // pred_check_branch
      %64 = sbr.rel (0) target = $region25
    $region24: #{tpu_custom_call.1} parent=1 // pred_region
      %65 = dma.done [#allocation6], 256
    $region25: #{tpu_custom_call.1} parent=1 // pred_fallthru
      _
    %66 = vsyncpa [#allocation5], 1
    %67 = vsyncpa [#allocation6], 1

</llo_original>
